<compile_context>
chip_gen: v5e
topology: v5e:2x2
jax: 0.10.0
libtpu: 0.0.40
codegen_flags: <defaults>
</compile_context>

<pallas_src>
import functools

import jax
import jax.numpy as jnp
from jax.experimental import pallas as pl
from jax.experimental.pallas import tpu as pltpu


def _round_up(x: int, m: int) -> int:
    return ((x + m - 1) // m) * m


def one_hidden_nn_kernel(x_ref, w1_ref, b1_ref, w2_ref, b2_ref, o_ref):
    # x arrives unpadded f32; cast to bf16 only for the MXU operand.
    x_bf16 = x_ref[...].astype(jnp.bfloat16)
    # hidden = sigmoid(x @ W_ih + b_ih): bf16 MXU matmul, f32 accumulate.
    h = jnp.dot(x_bf16, w1_ref[...], preferred_element_type=jnp.float32)
    h = jax.nn.sigmoid(h + b1_ref[...])            # (tb, Hp) + (1, Hp), f32 VPU/EUP
    # output = hidden @ W_ho + b_ho: cast h to bf16 for the MXU, f32 accumulate.
    out = jnp.dot(h.astype(w2_ref.dtype), w2_ref[...],
                  preferred_element_type=jnp.float32)
    o_ref[...] = (out + b2_ref[...]).astype(o_ref.dtype)   # (tb, O) store, no O pad


def prepare_params(w_ih, b_ih, w_ho, b_ho):
    """One-time weight prep (call once, reuse): pad H to 128 lanes, cast MXU
    operands to bf16, keep biases f32.  Zero rows in W_ho kill the
    sigmoid(0)=0.5 contribution of the padded hidden lanes, so results are
    exact for the real columns."""
    In, H = w_ih.shape
    O = w_ho.shape[1]
    H_p = _round_up(H, 128)
    w1_p = jnp.pad(w_ih, ((0, 0), (0, H_p - H))).astype(jnp.bfloat16)   # (In, Hp)
    b1_p = jnp.pad(b_ih, ((0, 0), (0, H_p - H))).astype(jnp.float32)    # (1, Hp)
    w2_p = jnp.pad(w_ho, ((0, H_p - H), (0, 0))).astype(jnp.bfloat16)   # (Hp, O)
    b2_p = b_ho.astype(jnp.float32)                                     # (1, O)
    return w1_p, b1_p, w2_p, b2_p


@functools.partial(jax.jit, static_argnames=("tb",))
def one_hidden_nn(x, w1_p, b1_p, w2_p, b2_p, *, tb=512):
    """x: (B, In) f32 (unpadded); prepared params from `prepare_params`.

    Returns (B, O) float32 == sigmoid(x @ W_ih + b_ih) @ W_ho + b_ho
    (bf16 MXU operands, f32 accumulation)."""
    B, In = x.shape
    H_p = w1_p.shape[1]
    O = w2_p.shape[1]

    # Batch tile: multiple of 8 sublanes, no bigger than needed.
    tb_eff = min(tb, _round_up(B, 8))
    # v7x megacore: if one tile would cover the whole batch, halve it so the
    # "parallel" axis has >= 2 grid steps to shard across the 2 TensorCores.
    if B >= 16 and pl.cdiv(B, tb_eff) < 2:
        tb_eff = _round_up(pl.cdiv(B, 2), 8)

    grid = (pl.cdiv(B, tb_eff),)   # last tile may overhang; OOB rows are discarded
    vmem = pltpu.MemorySpace.VMEM

    out = pl.pallas_call(
        one_hidden_nn_kernel,
        out_shape=jax.ShapeDtypeStruct((B, O), jnp.float32),
        grid=grid,
        in_specs=[
            # x: tiled over batch, unpadded (In == full array dim is legal).
            pl.BlockSpec((tb_eff, In), lambda i: (i, 0), memory_space=vmem),
            # weights / biases: constant index_map -> resident in VMEM across tiles
            pl.BlockSpec((In, H_p), lambda i: (0, 0), memory_space=vmem),
            pl.BlockSpec((1, H_p), lambda i: (0, 0), memory_space=vmem),
            pl.BlockSpec((H_p, O), lambda i: (0, 0), memory_space=vmem),
            pl.BlockSpec((1, O), lambda i: (0, 0), memory_space=vmem),
        ],
        # Output block last dim = O = full array dim: no O padding, no slice,
        # minimal writeback traffic (masked vst is cheaper than 8x more bytes).
        out_specs=pl.BlockSpec((tb_eff, O), lambda i: (i, 0), memory_space=vmem),
        compiler_params=pltpu.CompilerParams(
            dimension_semantics=("parallel",),      # megacore-shardable batch axis
            vmem_limit_bytes=32 * 1024 * 1024,      # lift v5e's 16 MiB scoped default
        ),
    )(x, w1_p, b1_p, w2_p, b2_p)

    return out


def init_params(key, input_size, hidden_size, output_size):
    """Deterministic init mimicking nn.Linear's U(-1/sqrt(fan_in), 1/sqrt(fan_in)).

    Weights are stored already transposed: (in_features, out_features)."""
    k1, k2, k3, k4 = jax.random.split(key, 4)
    bound1 = 1.0 / jnp.sqrt(input_size)
    bound2 = 1.0 / jnp.sqrt(hidden_size)
    w_ih = jax.random.uniform(k1, (input_size, hidden_size), jnp.float32,
                              -bound1, bound1)
    b_ih = jax.random.uniform(k2, (1, hidden_size), jnp.float32, -bound1, bound1)
    w_ho = jax.random.uniform(k3, (hidden_size, output_size), jnp.float32,
                              -bound2, bound2)
    b_ho = jax.random.uniform(k4, (1, output_size), jnp.float32, -bound2, bound2)
    return w_ih, b_ih, w_ho, b_ho


if __name__ == "__main__":
    batch, input_size, hidden_size, output_size = 8, 32, 64, 16

    key = jax.random.PRNGKey(0)
    kx, kp = jax.random.split(key)
    x = jax.random.normal(kx, (batch, input_size), jnp.float32)
    w_ih, b_ih, w_ho, b_ho = init_params(kp, input_size, hidden_size, output_size)

    # One-time weight prep (padding + bf16 cast happens here, not per call).
    params = prepare_params(w_ih, b_ih, w_ho, b_ho)
    params = jax.tree_util.tree_map(jax.block_until_ready, params)

    out = one_hidden_nn(x, *params)
    out = jax.block_until_ready(out)

    # Reference: plain f32 JAX forward (bf16 MXU operands => loose tolerance).
    ref_f32 = jax.nn.sigmoid(x @ w_ih + b_ih) @ w_ho + b_ho
    # Reference matching the kernel's bf16 casts (tight tolerance).
    xb = x.astype(jnp.bfloat16)
    w1b = w_ih.astype(jnp.bfloat16)
    w2b = w_ho.astype(jnp.bfloat16)
    h_ref = jax.nn.sigmoid(
        jnp.dot(xb, w1b, preferred_element_type=jnp.float32) + b_ih)
    ref_bf16 = jnp.dot(h_ref.astype(jnp.bfloat16), w2b,
                       preferred_element_type=jnp.float32) + b_ho

    assert out.shape == (batch, output_size)
    assert out.dtype == jnp.float32
    assert jnp.allclose(out, ref_bf16, atol=2e-3, rtol=2e-3)
    assert jnp.allclose(out, ref_f32, atol=3e-2, rtol=3e-2)

    print("KERNEL_OK")
</pallas_src>

<mosaic_0001>
module attributes {stable_mosaic.version = 11 : i64} {
  func.func @one_hidden_nn_kernel(%arg0: i32, %arg1: memref<8x32xf32, #tpu.memory_space<vmem>>, %arg2: memref<32x128xbf16, #tpu.memory_space<vmem>>, %arg3: memref<1x128xf32, #tpu.memory_space<vmem>>, %arg4: memref<128x16xbf16, #tpu.memory_space<vmem>>, %arg5: memref<1x16xf32, #tpu.memory_space<vmem>>, %arg6: memref<8x16xf32, #tpu.memory_space<vmem>>) attributes {dimension_semantics = [#tpu.dimension_semantics<parallel>], iteration_bounds = array<i64: 1>, scalar_prefetch = 0 : i64, scratch_operands = 0 : i64, tpu.core_type = #tpu.core_type<tc>, window_params = [{transform_indices = @transform_0, window_bounds = array<i64: 8, 32>}, {pipeline_mode = #tpu.pipeline_mode<synchronous>, transform_indices = @transform_1, window_bounds = array<i64: 32, 128>}, {pipeline_mode = #tpu.pipeline_mode<synchronous>, transform_indices = @transform_2, window_bounds = array<i64: 1, 128>}, {pipeline_mode = #tpu.pipeline_mode<synchronous>, transform_indices = @transform_3, window_bounds = array<i64: 128, 16>}, {pipeline_mode = #tpu.pipeline_mode<synchronous>, transform_indices = @transform_4, window_bounds = array<i64: 1, 16>}, {transform_indices = @transform_5, window_bounds = array<i64: 8, 16>}]} {
    %c0 = arith.constant 0 : index
    %c0_0 = arith.constant 0 : index
    %0 = vector.load %arg1[%c0, %c0_0] : memref<8x32xf32, #tpu.memory_space<vmem>>, vector<8x32xf32>
    %1 = arith.truncf %0 : vector<8x32xf32> to vector<8x32xbf16>
    %c0_1 = arith.constant 0 : index
    %c0_2 = arith.constant 0 : index
    %2 = vector.load %arg2[%c0_1, %c0_2] : memref<32x128xbf16, #tpu.memory_space<vmem>>, vector<32x128xbf16>
    %cst = arith.constant dense<0.000000e+00> : vector<8x128xf32>
    %3 = tpu.matmul %1, %2, %cst {dimension_numbers = #tpu.dot_dimension_numbers<[1], [0], [0], [1], [0, 0, 1, 1], [], []>} : vector<8x32xbf16>, vector<32x128xbf16>, vector<8x128xf32> -> vector<8x128xf32>
    %c0_3 = arith.constant 0 : index
    %c0_4 = arith.constant 0 : index
    %4 = vector.load %arg3[%c0_3, %c0_4] : memref<1x128xf32, #tpu.memory_space<vmem>>, vector<1x128xf32>
    %5 = vector.broadcast %4 : vector<1x128xf32> to vector<8x128xf32>
    %6 = arith.addf %3, %5 : vector<8x128xf32>
    %7 = arith.negf %6 : vector<8x128xf32>
    %8 = math.exp %7 : vector<8x128xf32>
    %cst_5 = arith.constant 1.000000e+00 : f32
    %9 = vector.broadcast %cst_5 : f32 to vector<8x128xf32>
    %10 = arith.addf %9, %8 : vector<8x128xf32>
    %11 = arith.divf %9, %10 : vector<8x128xf32>
    %12 = arith.truncf %11 : vector<8x128xf32> to vector<8x128xbf16>
    %c0_6 = arith.constant 0 : index
    %c0_7 = arith.constant 0 : index
    %13 = vector.load %arg4[%c0_6, %c0_7] : memref<128x16xbf16, #tpu.memory_space<vmem>>, vector<128x16xbf16>
    %cst_8 = arith.constant dense<0.000000e+00> : vector<8x16xf32>
    %14 = tpu.matmul %12, %13, %cst_8 {dimension_numbers = #tpu.dot_dimension_numbers<[1], [0], [0], [1], [0, 0, 1, 1], [], []>} : vector<8x128xbf16>, vector<128x16xbf16>, vector<8x16xf32> -> vector<8x16xf32>
    %c0_9 = arith.constant 0 : index
    %c0_10 = arith.constant 0 : index
    %15 = vector.load %arg5[%c0_9, %c0_10] : memref<1x16xf32, #tpu.memory_space<vmem>>, vector<1x16xf32>
    %16 = vector.broadcast %15 : vector<1x16xf32> to vector<8x16xf32>
    %17 = arith.addf %14, %16 : vector<8x16xf32>
    %c0_11 = arith.constant 0 : index
    %c0_12 = arith.constant 0 : index
    %18 = vector.load %arg6[%c0_11, %c0_12] : memref<8x16xf32, #tpu.memory_space<vmem>>, vector<8x16xf32>
    tpu.vector_store %arg6[%c0_11, %c0_12], %17 {strides = array<i32>} : memref<8x16xf32, #tpu.memory_space<vmem>>, vector<8x16xf32>,
    return
  }
  func.func @transform_0(%arg0: i32) -> (i32, i32) {
    %c0_i32 = arith.constant 0 : i32
    %c0_i32_0 = arith.constant 0 : i32
    return %arg0, %c0_i32 : i32, i32
  }
  func.func @transform_1(%arg0: i32) -> (i32, i32) {
    %c0_i32 = arith.constant 0 : i32
    %c0_i32_0 = arith.constant 0 : i32
    %c0_i32_1 = arith.constant 0 : i32
    return %c0_i32, %c0_i32_0 : i32, i32
  }
  func.func @transform_2(%arg0: i32) -> (i32, i32) {
    %c0_i32 = arith.constant 0 : i32
    %c0_i32_0 = arith.constant 0 : i32
    %c0_i32_1 = arith.constant 0 : i32
    return %c0_i32, %c0_i32_0 : i32, i32
  }
  func.func @transform_3(%arg0: i32) -> (i32, i32) {
    %c0_i32 = arith.constant 0 : i32
    %c0_i32_0 = arith.constant 0 : i32
    %c0_i32_1 = arith.constant 0 : i32
    return %c0_i32, %c0_i32_0 : i32, i32
  }
  func.func @transform_4(%arg0: i32) -> (i32, i32) {
    %c0_i32 = arith.constant 0 : i32
    %c0_i32_0 = arith.constant 0 : i32
    %c0_i32_1 = arith.constant 0 : i32
    return %c0_i32, %c0_i32_0 : i32, i32
  }
  func.func @transform_5(%arg0: i32) -> (i32, i32) {
    %c0_i32 = arith.constant 0 : i32
    %c0_i32_0 = arith.constant 0 : i32
    return %arg0, %c0_i32 : i32, i32
  }
}

</mosaic_0001>

<llo_original>
// kernel: one_hidden_nn.1
$region0: #{one_hidden_nn.1}
  #allocation0 [shape = 'u32[]', space=smem, size = 0x4, offset = 0x4, fixed_abs, tag = 'smem constant byte address 0x4 - core index']
  #allocation1 [shape = 'u32[72,128]{1,0:T(1,128)}', space=vmem, size = 0x9000, scoped, tag = 'internal scratch']
  %s0 = inlined_call_operand.vmem [shape: f32[8,32], index: 0, kind: input, shape index: {}]
  %s1 = inlined_call_operand.vmem [shape: bf16[32,128], index: 1, kind: input, shape index: {}]
  %s2 = inlined_call_operand.vmem [shape: f32[1,128], index: 2, kind: input, shape index: {}]
  %s3 = inlined_call_operand.vmem [shape: bf16[128,16], index: 3, kind: input, shape index: {}]
  %s4 = inlined_call_operand.vmem [shape: f32[1,16], index: 4, kind: input, shape index: {}]
  %s5 = inlined_call_operand.hbm [shape: f32[8,16], index: 5, kind: output, shape index: {}]
  %s6 = sld [smem:[#allocation0]]
  $region30: #{one_hidden_nn.1} parent=0
    _
  %s8 = ssub.s32 1, %s6
  %s9 = scalar_select 0, %s8, %s6
  $region1: #{one_hidden_nn.1} parent=0
    #allocation2 [shape = 'u8[4096]{0}', space=vmem, size = 0x1000, scoped, tag = 'output window, operand 0, single buffered']
    #allocation3 [shape = 's32[1]{0}', space=sflag, size = 0x4, scoped, tag = 'scoped memory for one_hidden_nn.1']
    %10 = vsyncpa [#allocation3], 0
    // Predicated region
    $region2: #{one_hidden_nn.1} parent=1 // pred_check
      _
    $region3: #{one_hidden_nn.1} parent=1 // pred_check_branch
      %12 = sbr.rel (0) target = $region5
    $region4: #{one_hidden_nn.1} parent=1 // pred_region
      _
    $region5: #{one_hidden_nn.1} parent=1 // pred_fallthru
      _
    // Predicated region
    $region6: #{one_hidden_nn.1} parent=1 // pred_check
      _
    $region7: #{one_hidden_nn.1} parent=1 // pred_check_branch
      %14 = sbr.rel (0) target = $region9
    $region8: #{one_hidden_nn.1} parent=1 // pred_region
      _
    $region9: #{one_hidden_nn.1} parent=1 // pred_fallthru
      _
    // Predicated region
    $region10: #{one_hidden_nn.1} parent=1 // pred_check
      _
    $region11: #{one_hidden_nn.1} parent=1 // pred_check_branch
      %16 = sbr.rel (0) target = $region13
    $region12: #{one_hidden_nn.1} parent=1 // pred_region
      _
    $region13: #{one_hidden_nn.1} parent=1 // pred_fallthru
      _
    // Predicated region
    $region14: #{one_hidden_nn.1} parent=1 // pred_check
      _
    $region15: #{one_hidden_nn.1} parent=1 // pred_check_branch
      %18 = sbr.rel (0) target = $region17
    $region16: #{one_hidden_nn.1} parent=1 // pred_region
      _
    $region17: #{one_hidden_nn.1} parent=1 // pred_fallthru
      _
    // Predicated region
    $region18: #{one_hidden_nn.1} parent=1 // pred_check
      _
    $region19: #{one_hidden_nn.1} parent=1 // pred_check_branch
      %20 = sbr.rel (0) target = $region21
    $region20: #{one_hidden_nn.1} parent=1 // pred_region
      _
    $region21: #{one_hidden_nn.1} parent=1 // pred_fallthru
      _
    %v22 = vld [vmem:[%s0] sm:$0xff]
    %v23 = vpack.c.bf16 %v22, %v22
    %v24 = vld [vmem:[%s1] sm:$0xf]
    %v25 = vld [vmem:[%s1 + $0x4] sm:$0xf]
    %v26 = vld [vmem:[%s1 + $0x8] sm:$0xf]
    %v27 = vld [vmem:[%s1 + $0xc] sm:$0xf]
    %v28 = vld [vmem:[%s2] sm:$0x1]
    %v30 = vperm.slane %v28, 0
    %v36 = vunpack.c.l.b16 %v24
    %v37 = vunpack.c.l.b16 %v25
    %v38 = vunpack.c.l.b16 %v26
    %v39 = vunpack.c.l.b16 %v27
    %v40 = vpack.c.b16 %v37, %v36
    %v41 = vpack.c.b16 %v39, %v38
    %vm44 = vcmask 261120
    %v46 = vsel %vm44, %v23, 0
    %48 = vmatpush.bf16.msra.mxu0 0
    %49 = vmatpush.bf16.msra.mxu0 0
    %50 = vmatpush.bf16.msra.mxu0 0
    %51 = vmatpush.bf16.msra.mxu0 0
    %52 = vmatpush.bf16.msra.mxu0 0
    %53 = vmatpush.bf16.msra.mxu0 0
    %54 = vmatpush.bf16.msra.mxu0 %v41
    %55 = vmatpush.bf16.msra.mxu0 %v40
    %56 = vmatmul.bf16.gmra.mxu0 %v46
    %v57 = vpop.f32.mrf.mxu0
    %v58 = vadd.f32 %v30, %v57
    %v59 = vpop.f32.mrf.mxu0
    %60 = vdwg.mxu0
    %v61 = vxor.u32 %v58, 2147483648
    %v62 = vmul.f32 %v61, 1.442695
    %v63 = vpow.pop %v62
    %v64 = vadd.f32 %v63, 1.0
    %v65 = vrcp.pop %v64
    %v66 = vmul.f32 %v64, %v65
    %v67 = vsub.f32 1.0, %v66
    %v68 = vmul.f32 %v65, %v67
    %v69 = vadd.f32 %v65, %v68
    %vm70 = vweird.f32 %v64
    %vm71 = vweird.f32 %v65
    %vm72 = vmor %vm70, %vm71
    %v73 = vsel %vm72, %v65, %v69
    %v74 = vand.u32 2147483647, %v64
    %vm75 = vcmp.eq.f32.partialorder %v74, 8.507059e+37
    %v76 = vand.u32 %v64, 2147483648
    %v77 = vor.u32 1.1754944e-38, %v76
    %v78 = vsel %vm75, %v77, %v73
    %v79 = vmul.f32 1.0, %v78
    %v80 = vpack.c.bf16 %v79, %v79
    %v81 = vld [vmem:[%s3] sm:$0xf]
    %v82 = vld [vmem:[%s3 + $0x4] sm:$0xf]
    %v83 = vld [vmem:[%s3 + $0x8] sm:$0xf]
    %v84 = vld [vmem:[%s3 + $0xc] sm:$0xf]
    %v85 = vld [vmem:[%s3 + $0x10] sm:$0xf]
    %v86 = vld [vmem:[%s3 + $0x14] sm:$0xf]
    %v87 = vld [vmem:[%s3 + $0x18] sm:$0xf]
    %v88 = vld [vmem:[%s3 + $0x1c] sm:$0xf]
    %v89 = vld [vmem:[%s3 + $0x20] sm:$0xf]
    %v90 = vld [vmem:[%s3 + $0x24] sm:$0xf]
    %v91 = vld [vmem:[%s3 + $0x28] sm:$0xf]
    %v92 = vld [vmem:[%s3 + $0x2c] sm:$0xf]
    %v93 = vld [vmem:[%s3 + $0x30] sm:$0xf]
    %v94 = vld [vmem:[%s3 + $0x34] sm:$0xf]
    %v95 = vld [vmem:[%s3 + $0x38] sm:$0xf]
    %v96 = vld [vmem:[%s3 + $0x3c] sm:$0xf]
    %v97 = vld [vmem:[%s4] sm:$0x1]
    %v99 = vperm.slane %v97, 0
    %v117 = vunpack.c.l.b16 %v81
    %v118 = vunpack.c.l.b16 %v82
    %v119 = vunpack.c.l.b16 %v83
    %v120 = vunpack.c.l.b16 %v84
    %v121 = vunpack.c.l.b16 %v85
    %v122 = vunpack.c.l.b16 %v86
    %v123 = vunpack.c.l.b16 %v87
    %v124 = vunpack.c.l.b16 %v88
    %v125 = vunpack.c.l.b16 %v89
    %v126 = vunpack.c.l.b16 %v90
    %v127 = vunpack.c.l.b16 %v91
    %v128 = vunpack.c.l.b16 %v92
    %v129 = vunpack.c.l.b16 %v93
    %v130 = vunpack.c.l.b16 %v94
    %v131 = vunpack.c.l.b16 %v95
    %v132 = vunpack.c.l.b16 %v96
    %v133 = vpack.c.b16 %v118, %v117
    %v134 = vpack.c.b16 %v120, %v119
    %v135 = vpack.c.b16 %v122, %v121
    %v136 = vpack.c.b16 %v124, %v123
    %v137 = vpack.c.b16 %v126, %v125
    %v138 = vpack.c.b16 %v128, %v127
    %v139 = vpack.c.b16 %v130, %v129
    %v140 = vpack.c.b16 %v132, %v131
    %149 = vmatpush.bf16.msra.mxu0 %v140
    %150 = vmatpush.bf16.msra.mxu0 %v139
    %151 = vmatpush.bf16.msra.mxu0 %v138
    %152 = vmatpush.bf16.msra.mxu0 %v137
    %153 = vmatpush.bf16.msra.mxu0 %v136
    %154 = vmatpush.bf16.msra.mxu0 %v135
    %155 = vmatpush.bf16.msra.mxu0 %v134
    %156 = vmatpush.bf16.msra.mxu0 %v133
    %157 = vmatmul.bf16.gmra.mxu0 %v80
    %v158 = vpop.f32.mrf.mxu0
    %v159 = vadd.f32 %v99, %v158
    %v160 = vpop.f32.mrf.mxu0
    %161 = vdwg.mxu0
    %vm162 = vcmask 130048
    %163 = vst.msk [vmem:[#allocation2] sm:$0xff] %vm162, %v159
    // Predicated region
    $region22: #{one_hidden_nn.1} parent=1 // pred_check
      _
    $region23: #{one_hidden_nn.1} parent=1 // pred_check_branch
      %165 = sbr.rel (0) target = $region25
    $region24: #{one_hidden_nn.1} parent=1 // pred_region
      %167 = vsyncadd [#allocation3], 0
      %s169 = sshll.u32 [#allocation2], 4
      %s170 = int_to_ptr.vmem [resolvable:$true] %s169
      %s171 = sshll.u32 %s5, 4
      %s172 = int_to_ptr.hbm [resolvable:$true] %s171
      %174 = dma.vmem_to_hbm [thread:$0]  %s170, 128, %s172, [#allocation3]
    $region25: #{one_hidden_nn.1} parent=1 // pred_fallthru
      _
    // Predicated region
    $region26: #{one_hidden_nn.1} parent=1 // pred_check
      _
    $region27: #{one_hidden_nn.1} parent=1 // pred_check_branch
      %176 = sbr.rel (0) target = $region29
    $region28: #{one_hidden_nn.1} parent=1 // pred_region
      %178 = dma.done [#allocation3], 128
    $region29: #{one_hidden_nn.1} parent=1 // pred_fallthru
      _
    %179 = vsyncpa [#allocation3], 1

</llo_original>
